<compile_context>
chip_gen: v5e
topology: v5e:2x2
jax: 0.10.0
libtpu: 0.0.40
codegen_flags: <defaults>
</compile_context>

<pallas_src>
import functools

import jax
import jax.numpy as jnp
from jax.experimental import pallas as pl
from jax.experimental.pallas import tpu as pltpu

_LANE = 128          # lane width
_BF16_PACK = 16      # bf16 native sublane-packed tile height
_NEG_LARGE = -1e30   # effectively -inf for padded class columns (no inf arithmetic)


def _round_up(x, m):
    return ((x + m - 1) // m) * m


def _vmem_budget_bytes():
    """Physical VMEM minus ~20% headroom for compiler-internal scratch."""
    try:
        cap = int(pltpu.get_tpu_info().vmem_capacity_bytes)
    except Exception:
        cap = 64 * 1024 * 1024  # conservative (v7x-sized) fallback
    return int(cap * 0.8)


def _log_softmax_store(logits, out_ref):
    m = jnp.max(logits, axis=1, keepdims=True)
    shifted = logits - m
    lse = jnp.log(jnp.sum(jnp.exp(shifted), axis=1, keepdims=True))
    out_ref[...] = (shifted - lse).astype(out_ref.dtype)


def mlp_fused_kernel(x_ref, w1_ref, b1_ref, w2_ref, b2_ref, out_ref):
    """Both weight matrices VMEM-resident; one batch tile per grid step."""
    h1 = jnp.dot(x_ref[...], w1_ref[...], preferred_element_type=jnp.float32)
    h1 = jnp.maximum(h1 + b1_ref[...], 0.0)                      # f32 epilogue (VPU)
    logits = jnp.dot(h1.astype(w2_ref.dtype), w2_ref[...],
                     preferred_element_type=jnp.float32)
    _log_softmax_store(logits + b2_ref[...], out_ref)            # padded cols carry -1e30 bias


def mlp_htiled_kernel(x_ref, w1_ref, b1_ref, w2_ref, b2_ref, out_ref, acc_ref):
    """Weight-tiled fallback: reduce over H blocks into an f32 logits accumulator."""
    h = pl.program_id(1)

    @pl.when(h == 0)
    def _():
        acc_ref[...] = jnp.zeros_like(acc_ref)

    h1 = jnp.dot(x_ref[...], w1_ref[...], preferred_element_type=jnp.float32)
    h1 = jnp.maximum(h1 + b1_ref[...], 0.0)
    acc_ref[...] += jnp.dot(h1.astype(w2_ref.dtype), w2_ref[...],
                            preferred_element_type=jnp.float32)

    @pl.when(h == pl.num_programs(1) - 1)
    def _():
        _log_softmax_store(acc_ref[...] + b2_ref[...], out_ref)


@functools.partial(
    jax.jit,
    static_argnames=("tile_b", "tile_h", "compute_dtype", "out_dtype",
                     "force_weight_tiled"),
)
def mlp_classifier_forward(x, w1, b1, w2, b2, *, tile_b=256, tile_h=None,
                           compute_dtype=jnp.bfloat16, out_dtype=jnp.float32,
                           force_weight_tiled=False):
    """x:(B,D), w1:(D,H), b1:(1,H), w2:(H,C), b2:(1,C) -> log_softmax logits (B,C)."""
    B, D = x.shape
    H = w1.shape[1]
    C = w2.shape[1]
    b1 = b1.reshape(1, H)
    b2 = b2.reshape(1, C)

    # Lane-dense padding of every contraction / output dim (exact, see header).
    Dp = _round_up(D, _LANE)
    Hp = _round_up(H, _LANE)
    Cp = _round_up(C, _LANE)

    cbytes = jnp.dtype(compute_dtype).itemsize
    obytes = jnp.dtype(out_dtype).itemsize

    # ---- batch tiling: multiples of the bf16 packed tile height (16) ----
    tile_b = max(_BF16_PACK, min(int(tile_b), _round_up(B, _BF16_PACK)))
    tile_b = _round_up(tile_b, _BF16_PACK)
    n_b = pl.cdiv(B, tile_b)
    if n_b == 1 and B >= 256:
        # Big batch in one tile: split it so both v7x TensorCores get a grid step.
        tile_b = _round_up(pl.cdiv(B, 2), _BF16_PACK)
        n_b = pl.cdiv(B, tile_b)

    budget = _vmem_budget_bytes()

    def fused_bytes(tb):
        # resident weights/biases (Buffered(1): single copy) + double-buffered tiles
        return ((Dp * Hp + Hp * Cp) * cbytes + (Hp + Cp) * 4
                + 2 * tb * Dp * cbytes + 2 * tb * Cp * obytes)

    use_tiled = bool(force_weight_tiled) or fused_bytes(_BF16_PACK) > budget

    if not use_tiled:
        while tile_b > _BF16_PACK and fused_bytes(tile_b) > budget:
            tile_b = max(_BF16_PACK, _round_up(tile_b // 2, _BF16_PACK))
        n_b = pl.cdiv(B, tile_b)
    else:
        th = Hp if tile_h is None else min(Hp, _round_up(int(tile_h), _LANE))

        def tiled_bytes(tb, t_h):
            return (2 * (Dp * t_h + t_h * Cp) * cbytes   # double-buffered W1/W2 blocks
                    + 2 * t_h * 4 + Cp * 4               # b1 blocks (dbl) + resident b2
                    + 2 * tb * Dp * cbytes               # streamed x tiles
                    + 2 * tb * Cp * obytes               # streamed out tiles
                    + tb * Cp * 4)                       # f32 logits accumulator

        while th > _LANE and tiled_bytes(tile_b, th) > budget:
            th = max(_LANE, _round_up(th // 2, _LANE))
        while tile_b > _BF16_PACK and tiled_bytes(tile_b, th) > budget:
            tile_b = max(_BF16_PACK, _round_up(tile_b // 2, _BF16_PACK))
        n_b = pl.cdiv(B, tile_b)
        tile_h = th
        n_h = pl.cdiv(Hp, tile_h)

    Bp = n_b * tile_b

    # ---- padded / cast operands (all exact; padded class cols get -1e30 bias) ----
    x_p = jnp.zeros((Bp, Dp), compute_dtype).at[:B, :D].set(x.astype(compute_dtype))
    w1_p = jnp.zeros((Dp, Hp), compute_dtype).at[:D, :H].set(w1.astype(compute_dtype))
    b1_p = jnp.zeros((1, Hp), jnp.float32).at[:, :H].set(b1.astype(jnp.float32))
    w2_p = jnp.zeros((Hp, Cp), compute_dtype).at[:H, :C].set(w2.astype(compute_dtype))
    b2_p = (jnp.full((1, Cp), _NEG_LARGE, jnp.float32)
            .at[:, :C].set(b2.astype(jnp.float32)))

    cost = pl.CostEstimate(
        flops=2 * Bp * (Dp * Hp + Hp * Cp),
        transcendentals=Bp * (Cp + 1),                      # exp per logit + log per row
        bytes_accessed=(Bp * Dp * cbytes + (Dp * Hp + Hp * Cp) * cbytes
                        + (Hp + Cp) * 4 + Bp * Cp * obytes),
    )
    cparams = pltpu.CompilerParams(
        dimension_semantics=("parallel",) if not use_tiled else ("parallel", "arbitrary"),
        vmem_limit_bytes=int(budget),
    )
    resident = dict(pipeline_mode=pl.Buffered(1))           # constant-index blocks

    if not use_tiled:
        out_p = pl.pallas_call(
            mlp_fused_kernel,
            out_shape=jax.ShapeDtypeStruct((Bp, Cp), out_dtype),
            grid=(n_b,),
            in_specs=[
                pl.BlockSpec((tile_b, Dp), lambda i: (i, 0)),          # streamed x tile
                pl.BlockSpec((Dp, Hp), lambda i: (0, 0), **resident),  # resident W1
                pl.BlockSpec((1, Hp), lambda i: (0, 0), **resident),   # resident b1
                pl.BlockSpec((Hp, Cp), lambda i: (0, 0), **resident),  # resident W2
                pl.BlockSpec((1, Cp), lambda i: (0, 0), **resident),   # resident b2
            ],
            out_specs=pl.BlockSpec((tile_b, Cp), lambda i: (i, 0)),
            compiler_params=cparams,
            cost_estimate=cost,
        )(x_p, w1_p, b1_p, w2_p, b2_p)
    else:
        out_p = pl.pallas_call(
            mlp_htiled_kernel,
            out_shape=jax.ShapeDtypeStruct((Bp, Cp), out_dtype),
            grid=(n_b, n_h),
            in_specs=[
                pl.BlockSpec((tile_b, Dp), lambda b, h: (b, 0)),       # x tile (revisited)
                pl.BlockSpec((Dp, tile_h), lambda b, h: (0, h)),       # W1 H-block
                pl.BlockSpec((1, tile_h), lambda b, h: (0, h)),        # b1 H-block
                pl.BlockSpec((tile_h, Cp), lambda b, h: (h, 0)),       # W2 H-block
                pl.BlockSpec((1, Cp), lambda b, h: (0, 0), **resident),
            ],
            out_specs=pl.BlockSpec((tile_b, Cp), lambda b, h: (b, 0)),
            scratch_shapes=[pltpu.VMEM((tile_b, Cp), jnp.float32)],
            compiler_params=cparams,
            cost_estimate=cost,
        )(x_p, w1_p, b1_p, w2_p, b2_p)

    return out_p[:B, :C]


def init_params(key, input_size, hidden_size, num_class):
    """xavier_normal_ on W.t() (i.e. (in, out) layout), zero biases — matches module init."""
    k1, k2 = jax.random.split(key)
    std1 = (2.0 / (input_size + hidden_size)) ** 0.5
    std2 = (2.0 / (hidden_size + num_class)) ** 0.5
    w1 = std1 * jax.random.normal(k1, (input_size, hidden_size), dtype=jnp.float32)
    w2 = std2 * jax.random.normal(k2, (hidden_size, num_class), dtype=jnp.float32)
    b1 = jnp.zeros((1, hidden_size), dtype=jnp.float32)
    b2 = jnp.zeros((1, num_class), dtype=jnp.float32)
    return w1, b1, w2, b2


def _reference(x, w1, b1, w2, b2, compute_dtype=jnp.bfloat16):
    """Plain-JAX reference with the same bf16-MXU / f32-accumulate numerics."""
    xb = x.astype(compute_dtype)
    h1 = jnp.maximum(
        jnp.dot(xb, w1.astype(compute_dtype), preferred_element_type=jnp.float32)
        + b1.astype(jnp.float32), 0.0)
    logits = jnp.dot(h1.astype(compute_dtype), w2.astype(compute_dtype),
                     preferred_element_type=jnp.float32) + b2.astype(jnp.float32)
    return jax.nn.log_softmax(logits, axis=1)


if __name__ == "__main__":
    key = jax.random.PRNGKey(0)
    kx, kp, kx2, kp2 = jax.random.split(key, 4)

    # ---- case 1: fused path (weights fully VMEM-resident, single grid step) ----
    B, D, H, C = 16, 32, 32, 8
    x = jax.random.normal(kx, (B, D), dtype=jnp.float32)
    w1, b1, w2, b2 = init_params(kp, D, H, C)
    out = jax.block_until_ready(mlp_classifier_forward(x, w1, b1, w2, b2))
    assert out.shape == (B, C)
    ref = _reference(x, w1, b1, w2, b2)
    assert jnp.allclose(out, ref, atol=5e-4, rtol=5e-4), "fused path mismatch vs. reference"
    assert bool(jnp.all(jnp.isfinite(out))), "non-finite values in fused output"

    # ---- case 2: weight-tiled fallback (arbitrary H axis + f32 accumulator),
    #      ragged batch (B=40 -> 3 tiles of 16, padded rows sliced off) ----
    B2, D2, H2, C2 = 40, 48, 256, 10
    x2 = jax.random.normal(kx2, (B2, D2), dtype=jnp.float32)
    p2 = init_params(kp2, D2, H2, C2)
    out2 = jax.block_until_ready(
        mlp_classifier_forward(x2, *p2, tile_b=16, tile_h=128, force_weight_tiled=True))
    assert out2.shape == (B2, C2)
    ref2 = _reference(x2, *p2)
    assert jnp.allclose(out2, ref2, atol=5e-4, rtol=5e-4), "tiled path mismatch vs. reference"
    assert bool(jnp.all(jnp.isfinite(out2))), "non-finite values in tiled output"

    print("KERNEL_OK")
</pallas_src>

<mosaic_0001>
module attributes {stable_mosaic.version = 11 : i64} {
  func.func @mlp_fused_kernel(%arg0: i32, %arg1: memref<16x128xbf16, #tpu.memory_space<vmem>>, %arg2: memref<128x128xbf16, #tpu.memory_space<vmem>>, %arg3: memref<1x128xf32, #tpu.memory_space<vmem>>, %arg4: memref<128x128xbf16, #tpu.memory_space<vmem>>, %arg5: memref<1x128xf32, #tpu.memory_space<vmem>>, %arg6: memref<16x128xf32, #tpu.memory_space<vmem>>) attributes {dimension_semantics = [#tpu.dimension_semantics<parallel>], iteration_bounds = array<i64: 1>, scalar_prefetch = 0 : i64, scratch_operands = 0 : i64, tpu.core_type = #tpu.core_type<tc>, window_params = [{transform_indices = @transform_0, window_bounds = array<i64: 16, 128>}, {pipeline_mode = #tpu.pipeline_mode<synchronous>, transform_indices = @transform_1, window_bounds = array<i64: 128, 128>}, {pipeline_mode = #tpu.pipeline_mode<synchronous>, transform_indices = @transform_2, window_bounds = array<i64: 1, 128>}, {pipeline_mode = #tpu.pipeline_mode<synchronous>, transform_indices = @transform_3, window_bounds = array<i64: 128, 128>}, {pipeline_mode = #tpu.pipeline_mode<synchronous>, transform_indices = @transform_4, window_bounds = array<i64: 1, 128>}, {transform_indices = @transform_5, window_bounds = array<i64: 16, 128>}]} {
    %c0 = arith.constant 0 : index
    %c0_0 = arith.constant 0 : index
    %0 = vector.load %arg1[%c0, %c0_0] : memref<16x128xbf16, #tpu.memory_space<vmem>>, vector<16x128xbf16>
    %c0_1 = arith.constant 0 : index
    %c0_2 = arith.constant 0 : index
    %1 = vector.load %arg2[%c0_1, %c0_2] : memref<128x128xbf16, #tpu.memory_space<vmem>>, vector<128x128xbf16>
    %cst = arith.constant dense<0.000000e+00> : vector<16x128xf32>
    %2 = tpu.matmul %0, %1, %cst {dimension_numbers = #tpu.dot_dimension_numbers<[1], [0], [0], [1], [0, 0, 1, 1], [], []>} : vector<16x128xbf16>, vector<128x128xbf16>, vector<16x128xf32> -> vector<16x128xf32>
    %c0_3 = arith.constant 0 : index
    %c0_4 = arith.constant 0 : index
    %3 = vector.load %arg3[%c0_3, %c0_4] : memref<1x128xf32, #tpu.memory_space<vmem>>, vector<1x128xf32>
    %4 = vector.broadcast %3 : vector<1x128xf32> to vector<16x128xf32>
    %5 = arith.addf %2, %4 : vector<16x128xf32>
    %cst_5 = arith.constant 0.000000e+00 : f32
    %6 = vector.broadcast %cst_5 : f32 to vector<16x128xf32>
    %7 = arith.maximumf %5, %6 : vector<16x128xf32>
    %8 = arith.truncf %7 : vector<16x128xf32> to vector<16x128xbf16>
    %c0_6 = arith.constant 0 : index
    %c0_7 = arith.constant 0 : index
    %9 = vector.load %arg4[%c0_6, %c0_7] : memref<128x128xbf16, #tpu.memory_space<vmem>>, vector<128x128xbf16>
    %cst_8 = arith.constant dense<0.000000e+00> : vector<16x128xf32>
    %10 = tpu.matmul %8, %9, %cst_8 {dimension_numbers = #tpu.dot_dimension_numbers<[1], [0], [0], [1], [0, 0, 1, 1], [], []>} : vector<16x128xbf16>, vector<128x128xbf16>, vector<16x128xf32> -> vector<16x128xf32>
    %c0_9 = arith.constant 0 : index
    %c0_10 = arith.constant 0 : index
    %11 = vector.load %arg5[%c0_9, %c0_10] : memref<1x128xf32, #tpu.memory_space<vmem>>, vector<1x128xf32>
    %12 = vector.broadcast %11 : vector<1x128xf32> to vector<16x128xf32>
    %13 = arith.addf %10, %12 : vector<16x128xf32>
    %cst_11 = arith.constant dense<0xFF800000> : vector<16xf32>
    %14 = vector.multi_reduction <maximumf>, %13, %cst_11 [1] : vector<16x128xf32> to vector<16xf32>
    %15 = vector.shape_cast %14 : vector<16xf32> to vector<16x1xf32>
    %16 = vector.broadcast %15 : vector<16x1xf32> to vector<16x128xf32>
    %17 = arith.subf %13, %16 : vector<16x128xf32>
    %18 = math.exp %17 : vector<16x128xf32>
    %cst_12 = arith.constant dense<0.000000e+00> : vector<16xf32>
    %19 = vector.multi_reduction <add>, %18, %cst_12 [1] : vector<16x128xf32> to vector<16xf32>
    %20 = vector.shape_cast %19 : vector<16xf32> to vector<16x1xf32>
    %21 = math.log %20 : vector<16x1xf32>
    %22 = vector.broadcast %21 : vector<16x1xf32> to vector<16x128xf32>
    %23 = arith.subf %17, %22 : vector<16x128xf32>
    %c0_13 = arith.constant 0 : index
    %c0_14 = arith.constant 0 : index
    %24 = vector.load %arg6[%c0_13, %c0_14] : memref<16x128xf32, #tpu.memory_space<vmem>>, vector<16x128xf32>
    tpu.vector_store %arg6[%c0_13, %c0_14], %23 {strides = array<i32>} : memref<16x128xf32, #tpu.memory_space<vmem>>, vector<16x128xf32>,
    return
  }
  func.func @transform_0(%arg0: i32) -> (i32, i32) {
    %c0_i32 = arith.constant 0 : i32
    %c0_i32_0 = arith.constant 0 : i32
    return %arg0, %c0_i32 : i32, i32
  }
  func.func @transform_1(%arg0: i32) -> (i32, i32) {
    %c0_i32 = arith.constant 0 : i32
    %c0_i32_0 = arith.constant 0 : i32
    %c0_i32_1 = arith.constant 0 : i32
    return %c0_i32, %c0_i32_0 : i32, i32
  }
  func.func @transform_2(%arg0: i32) -> (i32, i32) {
    %c0_i32 = arith.constant 0 : i32
    %c0_i32_0 = arith.constant 0 : i32
    %c0_i32_1 = arith.constant 0 : i32
    return %c0_i32, %c0_i32_0 : i32, i32
  }
  func.func @transform_3(%arg0: i32) -> (i32, i32) {
    %c0_i32 = arith.constant 0 : i32
    %c0_i32_0 = arith.constant 0 : i32
    %c0_i32_1 = arith.constant 0 : i32
    return %c0_i32, %c0_i32_0 : i32, i32
  }
  func.func @transform_4(%arg0: i32) -> (i32, i32) {
    %c0_i32 = arith.constant 0 : i32
    %c0_i32_0 = arith.constant 0 : i32
    %c0_i32_1 = arith.constant 0 : i32
    return %c0_i32, %c0_i32_0 : i32, i32
  }
  func.func @transform_5(%arg0: i32) -> (i32, i32) {
    %c0_i32 = arith.constant 0 : i32
    %c0_i32_0 = arith.constant 0 : i32
    return %arg0, %c0_i32 : i32, i32
  }
}

</mosaic_0001>

<llo_original>
// kernel: mlp_classifier_forward.1
$region0: #{mlp_classifier_forward.1}
  #allocation0 [shape = 'u32[]', space=smem, size = 0x4, offset = 0x4, fixed_abs, tag = 'smem constant byte address 0x4 - core index']
  #allocation1 [shape = 'u32[72,128]{1,0:T(1,128)}', space=vmem, size = 0x9000, scoped, tag = 'internal scratch']
  %s0 = inlined_call_operand.vmem [shape: bf16[16,128], index: 0, kind: input, shape index: {}]
  %s1 = inlined_call_operand.vmem [shape: bf16[128,128], index: 1, kind: input, shape index: {}]
  %s2 = inlined_call_operand.vmem [shape: f32[1,128], index: 2, kind: input, shape index: {}]
  %s3 = inlined_call_operand.vmem [shape: bf16[128,128], index: 3, kind: input, shape index: {}]
  %s4 = inlined_call_operand.vmem [shape: f32[1,128], index: 4, kind: input, shape index: {}]
  %s5 = inlined_call_operand.vmem [shape: f32[16,128], index: 5, kind: output, shape index: {}]
  %s6 = sld [smem:[#allocation0]]
  $region30: #{mlp_classifier_forward.1} parent=0
    _
  %s8 = ssub.s32 1, %s6
  %s9 = scalar_select 0, %s8, %s6
  // Predicated region
  $region2: #{mlp_classifier_forward.1} parent=0 // pred_check
    _
  $region3: #{mlp_classifier_forward.1} parent=0 // pred_check_branch
    %11 = sbr.rel (0) target = $region5
  $region4: #{mlp_classifier_forward.1} parent=0 // pred_region
    _
  $region5: #{mlp_classifier_forward.1} parent=0 // pred_fallthru
    _
  // Predicated region
  $region6: #{mlp_classifier_forward.1} parent=0 // pred_check
    _
  $region7: #{mlp_classifier_forward.1} parent=0 // pred_check_branch
    %13 = sbr.rel (0) target = $region9
  $region8: #{mlp_classifier_forward.1} parent=0 // pred_region
    _
  $region9: #{mlp_classifier_forward.1} parent=0 // pred_fallthru
    _
  // Predicated region
  $region10: #{mlp_classifier_forward.1} parent=0 // pred_check
    _
  $region11: #{mlp_classifier_forward.1} parent=0 // pred_check_branch
    %15 = sbr.rel (0) target = $region13
  $region12: #{mlp_classifier_forward.1} parent=0 // pred_region
    _
  $region13: #{mlp_classifier_forward.1} parent=0 // pred_fallthru
    _
  // Predicated region
  $region14: #{mlp_classifier_forward.1} parent=0 // pred_check
    _
  $region15: #{mlp_classifier_forward.1} parent=0 // pred_check_branch
    %17 = sbr.rel (0) target = $region17
  $region16: #{mlp_classifier_forward.1} parent=0 // pred_region
    _
  $region17: #{mlp_classifier_forward.1} parent=0 // pred_fallthru
    _
  // Predicated region
  $region18: #{mlp_classifier_forward.1} parent=0 // pred_check
    _
  $region19: #{mlp_classifier_forward.1} parent=0 // pred_check_branch
    %19 = sbr.rel (0) target = $region21
  $region20: #{mlp_classifier_forward.1} parent=0 // pred_region
    _
  $region21: #{mlp_classifier_forward.1} parent=0 // pred_fallthru
    _
  %v20 = vld [vmem:[%s0] sm:$0xf]
  %v21 = vld [vmem:[%s0 + $0x4] sm:$0xf]
  %v22 = vld [vmem:[%s1] sm:$0xf]
  %v23 = vld [vmem:[%s1 + $0x4] sm:$0xf]
  %v24 = vld [vmem:[%s1 + $0x8] sm:$0xf]
  %v25 = vld [vmem:[%s1 + $0xc] sm:$0xf]
  %v26 = vld [vmem:[%s1 + $0x10] sm:$0xf]
  %v27 = vld [vmem:[%s1 + $0x14] sm:$0xf]
  %v28 = vld [vmem:[%s1 + $0x18] sm:$0xf]
  %v29 = vld [vmem:[%s1 + $0x1c] sm:$0xf]
  %v30 = vld [vmem:[%s1 + $0x20] sm:$0xf]
  %v31 = vld [vmem:[%s1 + $0x24] sm:$0xf]
  %v32 = vld [vmem:[%s1 + $0x28] sm:$0xf]
  %v33 = vld [vmem:[%s1 + $0x2c] sm:$0xf]
  %v34 = vld [vmem:[%s1 + $0x30] sm:$0xf]
  %v35 = vld [vmem:[%s1 + $0x34] sm:$0xf]
  %v36 = vld [vmem:[%s1 + $0x38] sm:$0xf]
  %v37 = vld [vmem:[%s1 + $0x3c] sm:$0xf]
  %v38 = vld [vmem:[%s2] sm:$0x1]
  %v40 = vperm.slane %v38, 0
  %v44 = vunpack.c.l.b16 %v20
  %v45 = vunpack.c.l.b16 %v21
  %v46 = vpack.c.b16 %v45, %v44
  %v64 = vunpack.c.l.b16 %v22
  %v65 = vunpack.c.l.b16 %v23
  %v66 = vunpack.c.l.b16 %v24
  %v67 = vunpack.c.l.b16 %v25
  %v68 = vunpack.c.l.b16 %v26
  %v69 = vunpack.c.l.b16 %v27
  %v70 = vunpack.c.l.b16 %v28
  %v71 = vunpack.c.l.b16 %v29
  %v72 = vunpack.c.l.b16 %v30
  %v73 = vunpack.c.l.b16 %v31
  %v74 = vunpack.c.l.b16 %v32
  %v75 = vunpack.c.l.b16 %v33
  %v76 = vunpack.c.l.b16 %v34
  %v77 = vunpack.c.l.b16 %v35
  %v78 = vunpack.c.l.b16 %v36
  %v79 = vunpack.c.l.b16 %v37
  %v80 = vpack.c.b16 %v65, %v64
  %v81 = vpack.c.b16 %v67, %v66
  %v82 = vpack.c.b16 %v69, %v68
  %v83 = vpack.c.b16 %v71, %v70
  %v84 = vpack.c.b16 %v73, %v72
  %v85 = vpack.c.b16 %v75, %v74
  %v86 = vpack.c.b16 %v77, %v76
  %v87 = vpack.c.b16 %v79, %v78
  %96 = vmatpush.bf16.msra.mxu0 %v87
  %97 = vmatpush.bf16.msra.mxu0 %v86
  %98 = vmatpush.bf16.msra.mxu0 %v85
  %99 = vmatpush.bf16.msra.mxu0 %v84
  %100 = vmatpush.bf16.msra.mxu0 %v83
  %101 = vmatpush.bf16.msra.mxu0 %v82
  %102 = vmatpush.bf16.msra.mxu0 %v81
  %103 = vmatpush.bf16.msra.mxu0 %v80
  %104 = vmatmul.bf16.gmra.mxu0 %v46
  %v105 = vpop.f32.mrf.mxu0
  %v106 = vadd.f32 %v40, %v105
  %v107 = vpop.f32.mrf.mxu0
  %v108 = vadd.f32 %v40, %v107
  %109 = vdwg.mxu0
  %v110 = vmax.f32 %v106, 0.0
  %v111 = vmax.f32 %v108, 0.0
  %v112 = vpack.c.bf16 %v111, %v110
  %v113 = vld [vmem:[%s3] sm:$0xf]
  %v114 = vld [vmem:[%s3 + $0x4] sm:$0xf]
  %v115 = vld [vmem:[%s3 + $0x8] sm:$0xf]
  %v116 = vld [vmem:[%s3 + $0xc] sm:$0xf]
  %v117 = vld [vmem:[%s3 + $0x10] sm:$0xf]
  %v118 = vld [vmem:[%s3 + $0x14] sm:$0xf]
  %v119 = vld [vmem:[%s3 + $0x18] sm:$0xf]
  %v120 = vld [vmem:[%s3 + $0x1c] sm:$0xf]
  %v121 = vld [vmem:[%s3 + $0x20] sm:$0xf]
  %v122 = vld [vmem:[%s3 + $0x24] sm:$0xf]
  %v123 = vld [vmem:[%s3 + $0x28] sm:$0xf]
  %v124 = vld [vmem:[%s3 + $0x2c] sm:$0xf]
  %v125 = vld [vmem:[%s3 + $0x30] sm:$0xf]
  %v126 = vld [vmem:[%s3 + $0x34] sm:$0xf]
  %v127 = vld [vmem:[%s3 + $0x38] sm:$0xf]
  %v128 = vld [vmem:[%s3 + $0x3c] sm:$0xf]
  %v129 = vld [vmem:[%s4] sm:$0x1]
  %v131 = vperm.slane %v129, 0
  %v149 = vunpack.c.l.b16 %v113
  %v150 = vunpack.c.l.b16 %v114
  %v151 = vunpack.c.l.b16 %v115
  %v152 = vunpack.c.l.b16 %v116
  %v153 = vunpack.c.l.b16 %v117
  %v154 = vunpack.c.l.b16 %v118
  %v155 = vunpack.c.l.b16 %v119
  %v156 = vunpack.c.l.b16 %v120
  %v157 = vunpack.c.l.b16 %v121
  %v158 = vunpack.c.l.b16 %v122
  %v159 = vunpack.c.l.b16 %v123
  %v160 = vunpack.c.l.b16 %v124
  %v161 = vunpack.c.l.b16 %v125
  %v162 = vunpack.c.l.b16 %v126
  %v163 = vunpack.c.l.b16 %v127
  %v164 = vunpack.c.l.b16 %v128
  %v165 = vpack.c.b16 %v150, %v149
  %v166 = vpack.c.b16 %v152, %v151
  %v167 = vpack.c.b16 %v154, %v153
  %v168 = vpack.c.b16 %v156, %v155
  %v169 = vpack.c.b16 %v158, %v157
  %v170 = vpack.c.b16 %v160, %v159
  %v171 = vpack.c.b16 %v162, %v161
  %v172 = vpack.c.b16 %v164, %v163
  %181 = vmatpush.bf16.msra.mxu0 %v172
  %182 = vmatpush.bf16.msra.mxu0 %v171
  %183 = vmatpush.bf16.msra.mxu0 %v170
  %184 = vmatpush.bf16.msra.mxu0 %v169
  %185 = vmatpush.bf16.msra.mxu0 %v168
  %186 = vmatpush.bf16.msra.mxu0 %v167
  %187 = vmatpush.bf16.msra.mxu0 %v166
  %188 = vmatpush.bf16.msra.mxu0 %v165
  %189 = vmatmul.bf16.gmra.mxu0 %v112
  %v190 = vpop.f32.mrf.mxu0
  %v191 = vadd.f32 %v131, %v190
  %v192 = vpop.f32.mrf.mxu0
  %v193 = vadd.f32 %v131, %v192
  %194 = vdwg.mxu0
  %195 = vmax.xlane.f32.xlu0 %v191
  %v196 = vpop.xlane.xlu0 %195
  %197 = vmax.xlane.f32.xlu0 %v193
  %v198 = vpop.xlane.xlu0 %197
  %v199 = vsub.f32 %v191, %v196
  %v200 = vsub.f32 %v193, %v198
  %v201 = vmul.f32 %v199, 1.442695
  %v202 = vpow.pop %v201
  %v203 = vmul.f32 %v200, 1.442695
  %v204 = vpow.pop %v203
  %205 = vadd.xlane.f32.xlu0 %v202
  %v206 = vpop.xlane.xlu0 %205
  %207 = vadd.xlane.f32.xlu0 %v204
  %v208 = vpop.xlane.xlu0 %207
  %v209 = vlog2.pop %v206
  %v210 = vmul.f32 %v209, 0.6931472
  %v211 = vlog2.pop %v208
  %v212 = vmul.f32 %v211, 0.6931472
  %v213 = vsub.f32 %v199, %v210
  %v214 = vsub.f32 %v200, %v212
  %215 = vst [vmem:[%s5] sm:$0xff] %v213
  %216 = vst [vmem:[%s5 + $0x8] sm:$0xff] %v214
  // Predicated region
  $region22: #{mlp_classifier_forward.1} parent=0 // pred_check
    _
  $region23: #{mlp_classifier_forward.1} parent=0 // pred_check_branch
    %218 = sbr.rel (0) target = $region25
  $region24: #{mlp_classifier_forward.1} parent=0 // pred_region
    _
  $region25: #{mlp_classifier_forward.1} parent=0 // pred_fallthru
    _
  // Predicated region
  $region26: #{mlp_classifier_forward.1} parent=0 // pred_check
    _
  $region27: #{mlp_classifier_forward.1} parent=0 // pred_check_branch
    %220 = sbr.rel (0) target = $region29
  $region28: #{mlp_classifier_forward.1} parent=0 // pred_region
    _
  $region29: #{mlp_classifier_forward.1} parent=0 // pred_fallthru
    _

</llo_original>
